<compile_context>
chip_gen: v7x
topology: tpu7x:2x2x1
jax: 0.10.0
libtpu: 0.0.40
codegen_flags: <defaults>
</compile_context>

<pallas_src>
import functools

import jax
import jax.numpy as jnp
from jax import lax
from jax.experimental import pallas as pl
from jax.experimental.pallas import tpu as pltpu

DROPOUT = 0.5


def _tpu_generation():
    """Returns (device_kind, is_v7x, is_v5_or_older, vmem_capacity_bytes)."""
    kind = ""
    try:
        kind = jax.devices()[0].device_kind.lower()
    except Exception:
        pass
    is_v7 = "v7" in kind
    is_v5_or_older = any(t in kind for t in ("v2", "v3", "v4", "v5"))
    try:
        vmem_cap = int(pltpu.get_tpu_info().vmem_capacity_bytes)
    except Exception:
        vmem_cap = (64 << 20) if is_v7 else (128 << 20)
    return kind, is_v7, is_v5_or_older, vmem_cap


def _dropout(z, p, key):
    """Inverted dropout applied once to the full (N, D) z (plain-JAX pre-pass)."""
    assert 0.0 <= p < 1.0, "dropout p must be in [0, 1)"
    if p == 0.0:
        return z
    keep = jax.random.bernoulli(key, 1.0 - p, z.shape)
    return jnp.where(keep, z / (1.0 - p), jnp.zeros_like(z))


def _pick_tile(n, want, align):
    """Largest t <= want such that n % t == 0 and (t % align == 0 or t == n)."""
    want = min(want, n)
    if want >= n:
        return n
    t = (want // align) * align
    while t >= align:
        if n % t == 0:
            return t
        t -= align
    return n  # no aligned divisor below `want`; full extent is always legal


def _sigmoid_store(logits_f32, adj_ref, act_dtype):
    # sigmoid(x) == 0.5*tanh(0.5*x) + 0.5 : one EUP op (tanh) + cheap VPU fmas,
    # instead of exp + add + divide.  act_dtype=bf16 on v6e/v7x keeps the N^2
    # transcendental stream off the critical path once writeback shrinks.
    x = logits_f32.astype(act_dtype)
    adj = 0.5 * jnp.tanh(0.5 * x) + 0.5
    adj_ref[...] = adj.astype(adj_ref.dtype)


def _decoder_kernel_resident(z_ref, adj_ref, *, tm, tn, act_dtype):
    """z kept whole-array resident in VMEM; slice row and column tiles from it."""
    i = pl.program_id(0)
    j = pl.program_id(1)
    zr = z_ref[pl.ds(pl.multiple_of(i * tm, tm), tm), :]
    zc = z_ref[pl.ds(pl.multiple_of(j * tn, tn), tn), :]
    logits = lax.dot_general(
        zr, zc, dimension_numbers=(((1,), (1,)), ((), ())),
        preferred_element_type=jnp.float32)
    _sigmoid_store(logits, adj_ref, act_dtype)


def _decoder_kernel_tiled(zr_ref, zc_ref, adj_ref, *, act_dtype):
    """Streaming path: row and column tiles delivered by BlockSpec pipelining."""
    logits = lax.dot_general(
        zr_ref[...], zc_ref[...],
        dimension_numbers=(((1,), (1,)), ((), ())),
        preferred_element_type=jnp.float32)
    _sigmoid_store(logits, adj_ref, act_dtype)


def inner_product_decoder(z, *, p=DROPOUT, training=False, rng_key=None,
                          tm=1024, tn=2048, out_dtype=jnp.bfloat16,
                          act_dtype=None, col_resident=None):
    """Pallas TPU forward of InnerProductDecoder.

    out_dtype defaults to bfloat16: the kernel is writeback-bound and sigmoid
    outputs in [0, 1] tolerate bf16 (~3 decimal digits).  Pass
    out_dtype=jnp.float32 for the exact torch dtype.
    """
    N, D = z.shape

    if training and p > 0.0:
        if rng_key is None:
            raise ValueError(
                "training=True with p > 0 requires an explicit rng_key "
                "(a default key would silently reuse the same dropout mask)")
        z = _dropout(z, p, rng_key)

    _, is_v7, is_v5_or_older, vmem_cap = _tpu_generation()

    # Per-generation scoped-VMEM budget: 48 MiB on v7x (64 MiB physical),
    # ~96 MiB on v5e/v6e (128 MiB physical).
    budget = min(int(0.75 * vmem_cap), 96 << 20)

    # v5e and older have no bf16 EUP path -> keep the tanh in f32 there.
    if act_dtype is None:
        act_dtype = jnp.float32 if is_v5_or_older else jnp.bfloat16

    z_bytes = z.dtype.itemsize
    out_bytes = jnp.dtype(out_dtype).itemsize

    # Keep z whole-array VMEM-resident when small: one DMA total, no per-step
    # column re-fetch (which would otherwise add ~N^2*D*z_bytes/tm input traffic).
    if col_resident is None:
        resident_threshold = (12 << 20) if is_v7 else (32 << 20)
        col_resident = (N * D * z_bytes) <= resident_threshold

    # Tile sizes: aligned divisors of N (no masked edge tiles), as large as the
    # VMEM budget allows; lane-dense tn is grown first / shrunk last-resort.
    tm = _pick_tile(N, tm, 8)
    tn = _pick_tile(N, tn, 128)

    def _in_vmem(tm_, tn_):
        if col_resident:
            return N * D * z_bytes                  # single-buffered resident z
        return 2 * (tm_ + tn_) * D * z_bytes        # double-buffered row + col tiles

    def _vmem_needed(tm_, tn_):
        return 2 * tm_ * tn_ * out_bytes + _in_vmem(tm_, tn_)

    fit_budget = int(0.75 * budget)
    while _vmem_needed(tm, tn) > fit_budget:
        if tn >= tm:
            new_tn = _pick_tile(N, max(128, tn // 2), 128)
            if new_tn < tn:
                tn = new_tn
                continue
        new_tm = _pick_tile(N, max(8, tm // 2), 8)
        if new_tm < tm:
            tm = new_tm
            continue
        break

    # Keep >= 2 blocks along a "parallel" axis so both TensorCores get work on
    # v7x (2 TCs/chip); only when an aligned divisor exists.
    if (N // tm) * (N // tn) < 2:
        tm_half = _pick_tile(N, max(8, tm // 2), 8)
        if N // tm_half >= 2:
            tm = tm_half

    grid = (N // tm, N // tn)

    if col_resident:
        kernel = functools.partial(
            _decoder_kernel_resident, tm=tm, tn=tn, act_dtype=act_dtype)
        # Whole-array VMEM placement: one DMA, no double-buffering of z.
        in_specs = [pl.BlockSpec(memory_space=pltpu.MemorySpace.VMEM)]
        args = (z,)
        input_bytes = N * D * z_bytes
    else:
        kernel = functools.partial(_decoder_kernel_tiled, act_dtype=act_dtype)
        in_specs = [
            pl.BlockSpec((tm, D), lambda i, j: (i, 0)),   # row tile of z
            pl.BlockSpec((tn, D), lambda i, j: (j, 0)),   # column tile of z
        ]
        args = (z, z)
        # Row tiles read once per grid row; column tiles re-fetched every step.
        input_bytes = N * D * z_bytes + grid[0] * N * D * z_bytes

    return pl.pallas_call(
        kernel,
        out_shape=jax.ShapeDtypeStruct((N, N), out_dtype),
        grid_spec=pltpu.PrefetchScalarGridSpec(
            num_scalar_prefetch=0,
            grid=grid,
            in_specs=in_specs,
            out_specs=pl.BlockSpec((tm, tn), lambda i, j: (i, j)),
        ),
        compiler_params=pltpu.CompilerParams(
            dimension_semantics=("parallel", "parallel"),
            vmem_limit_bytes=int(budget)),
        cost_estimate=pl.CostEstimate(
            flops=2 * N * N * D,
            transcendentals=N * N,
            bytes_accessed=N * N * out_bytes + input_bytes),
    )(*args)


if __name__ == "__main__":
    key = jax.random.PRNGKey(0)
    k_z, k_drop = jax.random.split(key)
    N, D = 128, 32
    z = jax.random.normal(k_z, (N, D), dtype=jnp.float32)
    ref = jax.nn.sigmoid(z @ z.T)

    # 1) Eval-mode forward, exact f32 path (activation + output in f32).
    adj = jax.block_until_ready(inner_product_decoder(
        z, p=DROPOUT, training=False, out_dtype=jnp.float32,
        act_dtype=jnp.float32))
    assert adj.shape == (N, N)
    assert jnp.allclose(adj, ref, atol=1e-4, rtol=1e-4), "eval mismatch vs reference"

    # 2) Training-mode forward: the dropout mask is generated in the plain-JAX
    #    pre-pass, so the kernel can be checked exactly against the same mask.
    adj_tr = jax.block_until_ready(inner_product_decoder(
        z, p=DROPOUT, training=True, rng_key=k_drop, out_dtype=jnp.float32,
        act_dtype=jnp.float32))
    z_drop = _dropout(z, DROPOUT, k_drop)
    ref_tr = jax.nn.sigmoid(z_drop @ z_drop.T)
    assert adj_tr.shape == (N, N)
    assert jnp.allclose(adj_tr, ref_tr, atol=1e-4, rtol=1e-4), "train mismatch vs reference"

    # 3) Default fast path: bf16 output, generation-appropriate act dtype,
    #    VMEM-resident z.
    adj_fast = jax.block_until_ready(inner_product_decoder(z, training=False))
    assert adj_fast.dtype == jnp.bfloat16
    assert jnp.allclose(adj_fast.astype(jnp.float32), ref, atol=2e-2, rtol=2e-2), \
        "bf16 fast path mismatch vs reference"

    # 4) Streaming (non-resident) column path, exercised explicitly.
    adj_stream = jax.block_until_ready(inner_product_decoder(
        z, training=False, col_resident=False, out_dtype=jnp.float32,
        act_dtype=jnp.float32))
    assert jnp.allclose(adj_stream, ref, atol=1e-4, rtol=1e-4), \
        "streaming path mismatch vs reference"

    print("KERNEL_OK")
</pallas_src>

<mosaic_0001>
module attributes {stable_mosaic.version = 11 : i64} {
  func.func @_decoder_kernel_resident(%arg0: i32, %arg1: i32, %arg2: memref<128x32xf32, #tpu.memory_space<vmem>>, %arg3: memref<64x128xf32, #tpu.memory_space<vmem>>) attributes {dimension_semantics = [#tpu.dimension_semantics<parallel>, #tpu.dimension_semantics<parallel>], iteration_bounds = array<i64: 2, 1>, scalar_prefetch = 0 : i64, scratch_operands = 0 : i64, tpu.core_type = #tpu.core_type<tc>, window_params = [{pipeline_mode = #tpu.pipeline_mode<synchronous>, transform_indices = @transform_0, window_bounds = array<i64: 128, 32>}, {transform_indices = @transform_1, window_bounds = array<i64: 64, 128>}]} {
    %c64_i32 = arith.constant 64 : i32
    %0 = arith.muli %arg0, %c64_i32 : i32
    %1 = tpu.assume_multiple %0, 64 : i32
    %2 = arith.index_cast %1 : i32 to index
    %c0 = arith.constant 0 : index
    %3 = vector.load %arg2[%2, %c0] : memref<128x32xf32, #tpu.memory_space<vmem>>, vector<64x32xf32>
    %c128_i32 = arith.constant 128 : i32
    %4 = arith.muli %arg1, %c128_i32 : i32
    %5 = tpu.assume_multiple %4, 128 : i32
    %6 = arith.index_cast %5 : i32 to index
    %c0_0 = arith.constant 0 : index
    %7 = vector.load %arg2[%6, %c0_0] : memref<128x32xf32, #tpu.memory_space<vmem>>, vector<128x32xf32>
    %cst = arith.constant dense<0.000000e+00> : vector<64x128xf32>
    %8 = tpu.matmul %3, %7, %cst {dimension_numbers = #tpu.dot_dimension_numbers<[1], [1], [0], [0], [0, 0, 1, 0], [], []>} : vector<64x32xf32>, vector<128x32xf32>, vector<64x128xf32> -> vector<64x128xf32>
    %cst_1 = arith.constant 5.000000e-01 : f32
    %9 = vector.broadcast %cst_1 : f32 to vector<64x128xf32>
    %10 = arith.mulf %9, %8 : vector<64x128xf32>
    %11 = math.tanh %10 : vector<64x128xf32>
    %cst_2 = arith.constant 5.000000e-01 : f32
    %12 = vector.broadcast %cst_2 : f32 to vector<64x128xf32>
    %13 = arith.mulf %12, %11 : vector<64x128xf32>
    %cst_3 = arith.constant 5.000000e-01 : f32
    %14 = vector.broadcast %cst_3 : f32 to vector<64x128xf32>
    %15 = arith.addf %13, %14 : vector<64x128xf32>
    %c0_4 = arith.constant 0 : index
    %c0_5 = arith.constant 0 : index
    %16 = vector.load %arg3[%c0_4, %c0_5] : memref<64x128xf32, #tpu.memory_space<vmem>>, vector<64x128xf32>
    tpu.vector_store %arg3[%c0_4, %c0_5], %15 {strides = array<i32>} : memref<64x128xf32, #tpu.memory_space<vmem>>, vector<64x128xf32>,
    return
  }
  func.func @transform_0(%arg0: i32, %arg1: i32) -> (i32, i32) {
    %c0_i32 = arith.constant 0 : i32
    %c0_i32_0 = arith.constant 0 : i32
    %c0_i32_1 = arith.constant 0 : i32
    return %c0_i32, %c0_i32_0 : i32, i32
  }
  func.func @transform_1(%arg0: i32, %arg1: i32) -> (i32, i32) {
    %c0_i32 = arith.constant 0 : i32
    return %arg0, %arg1 : i32, i32
  }
}

</mosaic_0001>

<llo_original>
// kernel: tpu_custom_call.1
$region0: #{tpu_custom_call.1}
  #allocation0 [shape = 'u32[]', space=smem, size = 0x4, offset = 0x4, fixed_abs, tag = 'smem constant byte address 0x4 - core index']
  #allocation1 [shape = 'u32[144,128]{1,0:T(1,128)}', space=vmem, size = 0x12000, scoped, tag = 'internal scratch']
  %s0 = inlined_call_operand.hbm [shape: f32[128,32], index: 0, kind: input, shape index: {}]
  %s1 = inlined_call_operand.hbm [shape: f32[128,128], index: 1, kind: output, shape index: {}]
  %s2 = sld [smem:[#allocation0]]
  $region41: #{tpu_custom_call.1} parent=0
    _
  %s4 = ssub.s32 1, %s2
  %s5 = scalar_select 0, %s4, %s2
  $region1: #{tpu_custom_call.1} parent=0
    #allocation2 [shape = 'u8[65536]{0}', space=vmem, size = 0x10000, scoped, tag = 'input window, operand 0, single buffered']
    #allocation3 [shape = 's32[2]{0}', space=sflag, size = 0x8, scoped, tag = 'scoped memory for tpu_custom_call.1']
    #allocation4 [shape = 's32[2]{0}', space=sflag, size = 0x8, scoped, tag = 'scoped memory for tpu_custom_call.1']
    #allocation5 [shape = 'u8[65536]{0}', space=vmem, size = 0x10000, scoped, tag = 'output window, operand 0']
    %6 = vsyncpa [#allocation3], 0
    %7 = vsyncpa [#allocation4], 0
    %s8 = scalar_lea.sflag [#allocation4], 1
    %9 = vsyncpa %s8, 0
    loop: start=0, step=1, limit=4
    $region2: #{tpu_custom_call.1} parent=1 // loop_pre_header
      _
    $region3: #{tpu_custom_call.1} parent=1 // loop_header
      %s11 = sphi 0, %s15
      %p12 = scmp.ge.s32.totalorder %s11, 4
      %s18 = sphi 0, %s30
      %s19 = sphi 0, %s26
      %s20 = sphi 0, %s18
      %s21 = sphi 0, %s19
      %s22 = sphi 0, %s20
      %s23 = sphi 0, %s21
      %s31 = sphi 0, %s31
      %s33 = sphi 0, %s31
      %s34 = sphi 0, %s33
      %s48 = sphi 0, %s34
      %s56 = sphi 0, %s58
      %s59 = sphi 0, %s56
      %s60 = sphi 0, %s59
      %s76 = sphi 0, %s60
    $region4: #{tpu_custom_call.1} parent=1 // loop_header_branch
      %14 = sbr.rel (%p12) target = $region8
    $region5: #{tpu_custom_call.1} parent=1 // loop_body
      %s16 = ssub.s32 %s11, 1
      %s17 = ssub.s32 %s11, 2
      %s24 = sadd.s32 1, %s19
      %p25 = scmp.ge.s32.totalorder %s24, 1
      %s26 = scalar_select %p25, 0, %s24
      %s27 = sadd.s32 1, %s18
      %s28 = scalar_select %p25, %s27, %s18
      %p29 = scmp.ge.s32.totalorder %s28, 2
      %s30 = scalar_select %p29, 0, %s28
      %s32 = sadd.s32 %s31, 1
      %p35 = scmp.eq.s32.totalorder %s11, 1
      %p36 = scmp.ne.s32.totalorder %s31, %s33
      %p37 = scmp.eq.s32.totalorder %s11, 0
      %p38 = por %p36, %p37
      %p39 = scmp.ne.s32.totalorder %s31, %s33
      %p40 = scmp.eq.s32.totalorder %s16, 1
      %p41 = por %p39, %p40
      %p42 = scmp.ne.s32.totalorder %s33, %s34
      %p43 = scmp.eq.s32.totalorder %s16, 0
      %p44 = por %p42, %p43
      %p45 = scmp.ne.s32.totalorder %s33, %s34
      %p46 = scmp.eq.s32.totalorder %s17, 1
      %p47 = por %p45, %p46
      %p49 = scmp.ne.s32.totalorder %s34, %s48
      %p50 = scmp.eq.s32.totalorder %s17, 0
      %p51 = por %p49, %p50
      %s52 = ssub.s32 %s18, %s30
      %s53 = ssub.s32 %s19, %s26
      %s54 = sor.u32 %s52, %s53
      %p55 = scmp.eq.s32.totalorder %s54, 0
      %s57 = sadd.s32 %s56, 1
      %s58 = scalar_select %p55, %s56, %s57
      %p61 = pneg %p55
      %p62 = scmp.eq.s32.totalorder %s11, 1
      %p63 = por %p61, %p62
      %p64 = scmp.ne.s32.totalorder %s56, %s59
      %p65 = scmp.eq.s32.totalorder %s11, 0
      %p66 = por %p64, %p65
      %p67 = scmp.ne.s32.totalorder %s56, %s59
      %p68 = scmp.eq.s32.totalorder %s16, 1
      %p69 = por %p67, %p68
      %p70 = scmp.ne.s32.totalorder %s59, %s60
      %p71 = scmp.eq.s32.totalorder %s16, 0
      %p72 = por %p70, %p71
      %p73 = scmp.ne.s32.totalorder %s59, %s60
      %p74 = scmp.eq.s32.totalorder %s17, 1
      %p75 = por %p73, %p74
      %p77 = scmp.ne.s32.totalorder %s60, %s76
      %p78 = scmp.eq.s32.totalorder %s17, 0
      %p79 = por %p77, %p78
      %p80 = scmp.le.s32.totalorder 1, %s11
      %p81 = scmp.lt.s32.totalorder %s11, 3
      %p82 = pnand %p80, %p81
      %p83 = pneg %p82
      // Predicated region
      $region9: #{tpu_custom_call.1} parent=5 // pred_check
        _
      $region10: #{tpu_custom_call.1} parent=5 // pred_check_branch
        %85 = sbr.rel (%p82) target = $region12
      $region11: #{tpu_custom_call.1} parent=5 // pred_region
        %s86 = ssub.s32 %s11, 1
        // Predicated region
        $region13: #{tpu_custom_call.1} parent=11 // pred_check
          %p87 = pneg %p44
        $region14: #{tpu_custom_call.1} parent=11 // pred_check_branch
          %89 = sbr.rel (%p87) target = $region16
        $region15: #{tpu_custom_call.1} parent=11 // pred_region
          %s91 = ssub.s32 2048, 2048
          %92 = vsyncadd [#allocation3], %s91
          %s93 = sshll.u32 [#allocation2], 4
          %s94 = int_to_ptr.vmem [resolvable:$true] %s93
          %99 = dma.hbm_to_vmem [thread:$0]  %s0, 2048, %s94, [#allocation3], 128, 128, 8
        $region16: #{tpu_custom_call.1} parent=11 // pred_fallthru
          _
      $region12: #{tpu_custom_call.1} parent=5 // pred_fallthru
        _
      %p100 = scmp.lt.s32.totalorder %s11, 2
      // Predicated region
      $region17: #{tpu_custom_call.1} parent=5 // pred_check
        %p101 = pneg %p100
      $region18: #{tpu_custom_call.1} parent=5 // pred_check_branch
        %103 = sbr.rel (%p101) target = $region20
      $region19: #{tpu_custom_call.1} parent=5 // pred_region
        _
      $region20: #{tpu_custom_call.1} parent=5 // pred_fallthru
        _
      %p104 = scmp.le.s32.totalorder 1, %s11
      %p105 = scmp.lt.s32.totalorder %s11, 3
      %p106 = pnand %p104, %p105
      %p107 = pneg %p106
      // Predicated region
      $region21: #{tpu_custom_call.1} parent=5 // pred_check
        _
      $region22: #{tpu_custom_call.1} parent=5 // pred_check_branch
        %109 = sbr.rel (%p106) target = $region24
      $region23: #{tpu_custom_call.1} parent=5 // pred_region
        %s110 = ssub.s32 %s11, 1
        // Predicated region
        $region25: #{tpu_custom_call.1} parent=23 // pred_check
          %p111 = pneg %p44
        $region26: #{tpu_custom_call.1} parent=23 // pred_check_branch
          %113 = sbr.rel (%p111) target = $region28
        $region27: #{tpu_custom_call.1} parent=23 // pred_region
          %114 = dma.done [#allocation3], 2048
        $region28: #{tpu_custom_call.1} parent=23 // pred_fallthru
          _
        %p115 = pneg %p44
        %p116 = pneg %p41
        %p117 = pneg %p72
        %p118 = pneg %p69
        %s119 = sand.u32 %s59, 1
        %s120 = scalar_lea.sflag [#allocation4], %s119
        %s121 = sand.u32 %s59, 1
        %s122 = smul.addr %s121, 64
        %s123 = scalar_lea.vmem [#allocation5], %s122
        %s124 = smul.u32 8, %s20
        %s125 = smul.u32 %s20, 64
        %s126 = scalar_lea.vmem [#allocation2], %s125
        %v127 = vld [vmem:[%s126] sm:$0xff]
        %v128 = vld [vmem:[%s126 + $0x8] sm:$0xff]
        %v129 = vld [vmem:[%s126 + $0x10] sm:$0xff]
        %v130 = vld [vmem:[%s126 + $0x18] sm:$0xff]
        %v131 = vld [vmem:[%s126 + $0x20] sm:$0xff]
        %v132 = vld [vmem:[%s126 + $0x28] sm:$0xff]
        %v133 = vld [vmem:[%s126 + $0x30] sm:$0xff]
        %v134 = vld [vmem:[%s126 + $0x38] sm:$0xff]
        %s135 = smul.u32 %s21, 128
        %s136 = scalar_lea.vmem [#allocation2], %s135
        %v137 = vld [vmem:[%s136] sm:$0xff]
        %v138 = vld [vmem:[%s136 + $0x8] sm:$0xff]
        %v139 = vld [vmem:[%s136 + $0x10] sm:$0xff]
        %v140 = vld [vmem:[%s136 + $0x18] sm:$0xff]
        %v141 = vld [vmem:[%s136 + $0x20] sm:$0xff]
        %v142 = vld [vmem:[%s136 + $0x28] sm:$0xff]
        %v143 = vld [vmem:[%s136 + $0x30] sm:$0xff]
        %v144 = vld [vmem:[%s136 + $0x38] sm:$0xff]
        %v145 = vld [vmem:[%s136 + $0x40] sm:$0xff]
        %v146 = vld [vmem:[%s136 + $0x48] sm:$0xff]
        %v147 = vld [vmem:[%s136 + $0x50] sm:$0xff]
        %v148 = vld [vmem:[%s136 + $0x58] sm:$0xff]
        %v149 = vld [vmem:[%s136 + $0x60] sm:$0xff]
        %v150 = vld [vmem:[%s136 + $0x68] sm:$0xff]
        %v151 = vld [vmem:[%s136 + $0x70] sm:$0xff]
        %v152 = vld [vmem:[%s136 + $0x78] sm:$0xff]
        %vm153 = vcmask 261120
        %v155 = vsel %vm153, %v127, 0
        %v158 = vsel %vm153, %v128, 0
        %v161 = vsel %vm153, %v129, 0
        %v164 = vsel %vm153, %v130, 0
        %v167 = vsel %vm153, %v131, 0
        %v170 = vsel %vm153, %v132, 0
        %v173 = vsel %vm153, %v133, 0
        %v176 = vsel %vm153, %v134, 0
        %v179 = vsel %vm153, %v137, 0
        %v182 = vsel %vm153, %v138, 0
        %v185 = vsel %vm153, %v139, 0
        %v188 = vsel %vm153, %v140, 0
        %v191 = vsel %vm153, %v141, 0
        %v194 = vsel %vm153, %v142, 0
        %v197 = vsel %vm153, %v143, 0
        %v200 = vsel %vm153, %v144, 0
        %v203 = vsel %vm153, %v145, 0
        %v206 = vsel %vm153, %v146, 0
        %v209 = vsel %vm153, %v147, 0
        %v212 = vsel %vm153, %v148, 0
        %v215 = vsel %vm153, %v149, 0
        %v218 = vsel %vm153, %v150, 0
        %v221 = vsel %vm153, %v151, 0
        %v224 = vsel %vm153, %v152, 0
        %226 = vmatprep.subr.mxu0 0.0
        %227 = vmatpush1.xpose.msra.mxu0 %v179
        %228 = vmatprep.subr.mxu0 0.0
        %229 = vmatpush1.xpose.msra.mxu0 %v182
        %230 = vmatprep.subr.mxu0 0.0
        %231 = vmatpush1.xpose.msra.mxu0 %v185
        %232 = vmatprep.subr.mxu0 0.0
        %233 = vmatpush1.xpose.msra.mxu0 %v188
        %234 = vmatprep.subr.mxu0 0.0
        %235 = vmatpush1.xpose.msra.mxu0 %v191
        %236 = vmatprep.subr.mxu0 0.0
        %237 = vmatpush1.xpose.msra.mxu0 %v194
        %238 = vmatprep.subr.mxu0 0.0
        %239 = vmatpush1.xpose.msra.mxu0 %v197
        %240 = vmatprep.subr.mxu0 0.0
        %241 = vmatpush1.xpose.msra.mxu0 %v200
        %242 = vmatprep.subr.mxu0 0.0
        %243 = vmatpush1.xpose.msra.mxu0 %v203
        %244 = vmatprep.subr.mxu0 0.0
        %245 = vmatpush1.xpose.msra.mxu0 %v206
        %246 = vmatprep.subr.mxu0 0.0
        %247 = vmatpush1.xpose.msra.mxu0 %v209
        %248 = vmatprep.subr.mxu0 0.0
        %249 = vmatpush1.xpose.msra.mxu0 %v212
        %250 = vmatprep.subr.mxu0 0.0
        %251 = vmatpush1.xpose.msra.mxu0 %v215
        %252 = vmatprep.subr.mxu0 0.0
        %253 = vmatpush1.xpose.msra.mxu0 %v218
        %254 = vmatprep.subr.mxu0 0.0
        %255 = vmatpush1.xpose.msra.mxu0 %v221
        %256 = vmatprep.subr.mxu0 0.0
        %257 = vmatpush1.xpose.msra.mxu0 %v224
        %258 = vmatprep.subr.mxu0 0.0
        %259 = vmatpush1.xpose.msra.mxu0 0.0
        %260 = vmatprep.subr.mxu0 0.0
        %261 = vmatpush1.xpose.msra.mxu0 0.0
        %262 = vmatprep.subr.mxu0 0.0
        %263 = vmatpush1.xpose.msra.mxu0 0.0
        %264 = vmatprep.subr.mxu0 0.0
        %265 = vmatpush1.xpose.msra.mxu0 0.0
        %266 = vmatprep.subr.mxu0 0.0
        %267 = vmatpush1.xpose.msra.mxu0 0.0
        %268 = vmatprep.subr.mxu0 0.0
        %269 = vmatpush1.xpose.msra.mxu0 0.0
        %270 = vmatprep.subr.mxu0 0.0
        %271 = vmatpush1.xpose.msra.mxu0 0.0
        %272 = vmatprep.subr.mxu0 0.0
        %273 = vmatpush1.xpose.msra.mxu0 0.0
        %274 = vmatprep.subr.mxu0 0.0
        %275 = vmatpush1.xpose.msra.mxu0 0.0
        %276 = vmatprep.subr.mxu0 0.0
        %277 = vmatpush1.xpose.msra.mxu0 0.0
        %278 = vmatprep.subr.mxu0 0.0
        %279 = vmatpush1.xpose.msra.mxu0 0.0
        %280 = vmatprep.subr.mxu0 0.0
        %281 = vmatpush1.xpose.msra.mxu0 0.0
        %282 = vmatprep.subr.mxu0 0.0
        %283 = vmatpush1.xpose.msra.mxu0 0.0
        %284 = vmatprep.subr.mxu0 0.0
        %285 = vmatpush1.xpose.msra.mxu0 0.0
        %286 = vmatprep.subr.mxu0 0.0
        %287 = vmatpush1.xpose.msra.mxu0 0.0
        %288 = vmatprep.subr.mxu0 0.0
        %289 = vmatpush1.xpose.msra.mxu0 0.0
        %290 = vmatprep.mubr.f32.mxu0 0.0
        %291 = vmatmul.mubr.f32.gmra.mrb[0].mxu0 %v155
        %v292 = vpop.f32.mrb[0].mxu0
        %v293 = vadd.f32 0.0, %v292
        %v294 = vpop.f32.mrb[0].mxu0
        %295 = vmatprep.mubr.f32.mxu0 0.0
        %296 = vmatmul.mubr.f32.gmra.mrb[0].mxu0 %v158
        %v297 = vpop.f32.mrb[0].mxu0
        %v298 = vadd.f32 0.0, %v297
        %v299 = vpop.f32.mrb[0].mxu0
        %300 = vmatprep.mubr.f32.mxu0 0.0
        %301 = vmatmul.mubr.f32.gmra.mrb[0].mxu0 %v161
        %v302 = vpop.f32.mrb[0].mxu0
        %v303 = vadd.f32 0.0, %v302
        %v304 = vpop.f32.mrb[0].mxu0
        %305 = vmatprep.mubr.f32.mxu0 0.0
        %306 = vmatmul.mubr.f32.gmra.mrb[0].mxu0 %v164
        %v307 = vpop.f32.mrb[0].mxu0
        %v308 = vadd.f32 0.0, %v307
        %v309 = vpop.f32.mrb[0].mxu0
        %310 = vmatprep.mubr.f32.mxu0 0.0
        %311 = vmatmul.mubr.f32.gmra.mrb[0].mxu0 %v167
        %v312 = vpop.f32.mrb[0].mxu0
        %v313 = vadd.f32 0.0, %v312
        %v314 = vpop.f32.mrb[0].mxu0
        %315 = vmatprep.mubr.f32.mxu0 0.0
        %316 = vmatmul.mubr.f32.gmra.mrb[0].mxu0 %v170
        %v317 = vpop.f32.mrb[0].mxu0
        %v318 = vadd.f32 0.0, %v317
        %v319 = vpop.f32.mrb[0].mxu0
        %320 = vmatprep.mubr.f32.mxu0 0.0
        %321 = vmatmul.mubr.f32.gmra.mrb[0].mxu0 %v173
        %v322 = vpop.f32.mrb[0].mxu0
        %v323 = vadd.f32 0.0, %v322
        %v324 = vpop.f32.mrb[0].mxu0
        %325 = vmatprep.mubr.f32.mxu0 0.0
        %326 = vmatmul.mubr.f32.gmra.mrb[0].mxu0 %v176
        %v327 = vpop.f32.mrb[0].mxu0
        %v328 = vadd.f32 0.0, %v327
        %v329 = vpop.f32.mrb[0].mxu0
        %330 = vdwg.mxu0
        %v331 = vmul.f32 %v293, 0.5
        %v332 = vmul.f32 %v298, 0.5
        %v333 = vmul.f32 %v303, 0.5
        %v334 = vmul.f32 %v308, 0.5
        %v335 = vmul.f32 %v313, 0.5
        %v336 = vmul.f32 %v318, 0.5
        %v337 = vmul.f32 %v323, 0.5
        %v338 = vmul.f32 %v328, 0.5
        %v339 = vtanh.pop %v331
        %v340 = vtanh.pop %v332
        %v341 = vtanh.pop %v333
        %v342 = vtanh.pop %v334
        %v343 = vtanh.pop %v335
        %v344 = vtanh.pop %v336
        %v345 = vtanh.pop %v337
        %v346 = vtanh.pop %v338
        %v347 = vmul.f32 %v339, 0.5
        %v348 = vmul.f32 %v340, 0.5
        %v349 = vmul.f32 %v341, 0.5
        %v350 = vmul.f32 %v342, 0.5
        %v351 = vmul.f32 %v343, 0.5
        %v352 = vmul.f32 %v344, 0.5
        %v353 = vmul.f32 %v345, 0.5
        %v354 = vmul.f32 %v346, 0.5
        %v355 = vadd.f32 %v347, 0.5
        %v356 = vadd.f32 %v348, 0.5
        %v357 = vadd.f32 %v349, 0.5
        %v358 = vadd.f32 %v350, 0.5
        %v359 = vadd.f32 %v351, 0.5
        %v360 = vadd.f32 %v352, 0.5
        %v361 = vadd.f32 %v353, 0.5
        %v362 = vadd.f32 %v354, 0.5
        %363 = vst [vmem:[%s123] sm:$0xff] %v355
        %364 = vst [vmem:[%s123 + $0x8] sm:$0xff] %v356
        %365 = vst [vmem:[%s123 + $0x10] sm:$0xff] %v357
        %366 = vst [vmem:[%s123 + $0x18] sm:$0xff] %v358
        %367 = vst [vmem:[%s123 + $0x20] sm:$0xff] %v359
        %368 = vst [vmem:[%s123 + $0x28] sm:$0xff] %v360
        %369 = vst [vmem:[%s123 + $0x30] sm:$0xff] %v361
        %370 = vst [vmem:[%s123 + $0x38] sm:$0xff] %v362
        %s371 = sand.u32 %s59, 1
        %s372 = scalar_lea.sflag [#allocation4], %s371
        %s373 = sand.u32 %s59, 1
        %s374 = smul.addr %s373, 64
        %s375 = scalar_lea.vmem [#allocation5], %s374
        // Predicated region
        $region29: #{tpu_custom_call.1} parent=23 // pred_check
          %p376 = pneg %p69
        $region30: #{tpu_custom_call.1} parent=23 // pred_check_branch
          %378 = sbr.rel (%p376) target = $region32
        $region31: #{tpu_custom_call.1} parent=23 // pred_region
          %s379 = smul.u32 8, %s20
          %s381 = ssub.s32 1024, 1024
          %382 = vsyncadd %s372, %s381
          %s383 = sadd.s32 %s21, %s379
          %s384 = smul.addr %s383, 128
          %s385 = scalar_lea.hbm %s1, %s384
          %s386 = sshll.u32 %s375, 4
          %s387 = int_to_ptr.vmem [resolvable:$true] %s386
          %392 = dma.vmem_to_hbm [thread:$0]  %s387, 1024, %s385, %s372, 128, 128, 8
        $region32: #{tpu_custom_call.1} parent=23 // pred_fallthru
          _
      $region24: #{tpu_custom_call.1} parent=5 // pred_fallthru
        _
      %p393 = scmp.le.s32.totalorder 2, %s11
      // Predicated region
      $region33: #{tpu_custom_call.1} parent=5 // pred_check
        %p394 = pneg %p393
      $region34: #{tpu_custom_call.1} parent=5 // pred_check_branch
        %396 = sbr.rel (%p394) target = $region36
      $region35: #{tpu_custom_call.1} parent=5 // pred_region
        %s397 = ssub.s32 %s11, 2
        // Predicated region
        $region37: #{tpu_custom_call.1} parent=35 // pred_check
          %p398 = pneg %p75
        $region38: #{tpu_custom_call.1} parent=35 // pred_check_branch
          %400 = sbr.rel (%p398) target = $region40
        $region39: #{tpu_custom_call.1} parent=35 // pred_region
          %s401 = sand.u32 %s60, 1
          %s402 = scalar_lea.sflag [#allocation4], %s401
          %s403 = sand.u32 %s60, 1
          %s404 = smul.addr %s403, 64
          %s405 = scalar_lea.vmem [#allocation5], %s404
          %406 = dma.done %s402, 1024
        $region40: #{tpu_custom_call.1} parent=35 // pred_fallthru
          _
      $region36: #{tpu_custom_call.1} parent=5 // pred_fallthru
        _
    $region6: #{tpu_custom_call.1} parent=1 // loop_footer
      %s15 = sadd.s32 1, %s11
    $region7: #{tpu_custom_call.1} parent=1 // loop_footer_branch
      %10 = sbr.rel target = $region3
    $region8: #{tpu_custom_call.1} parent=1 // loop_exit
      _
    %407 = vsyncpa [#allocation3], 1
    %s408 = scalar_lea.sflag [#allocation3], 1
    %409 = vsyncpa %s408, 1
    %410 = vsyncpa [#allocation4], 1
    %s411 = scalar_lea.sflag [#allocation4], 1
    %412 = vsyncpa %s411, 1

</llo_original>
